<compile_context>
chip_gen: v6e
topology: v6e:2x2x1
jax: 0.10.0
libtpu: 0.0.40
codegen_flags: <defaults>
</compile_context>

<pallas_src>
import jax
import jax.numpy as jnp
from jax.experimental import pallas as pl
from jax.experimental.pallas import tpu as pltpu

_LANE = 128
_SUBLANE = 8
# Budget for the pipelined (C, T) blocks: 2 inputs + 2 outputs, double-buffered,
# f32.  Kept <= ~12 MiB so even v5e's 16 MiB default scoped VMEM is safe; the
# real requirement is also communicated via vmem_limit_bytes below.
_BLOCK_VMEM_BUDGET = 12 << 20
_MAX_T = 32 * 1024   # lane-tile ceiling (review: 8K-32K for small C)


def _round_up(x, m):
    return (x + m - 1) // m * m


def _branch(x, w1, b1, w2, b2):
    """y = W2 @ leaky_relu(W1 @ x + b1, 0.1) + b2 on a (C, T) f32 tile."""
    C = x.shape[0]

    if C <= 16:
        # Tiny contraction: unrolled VPU broadcast-MACs on full-width vregs;
        # a CxC contraction with C<=16 would waste the MXU.  (If XLU broadcasts
        # ever become the binding slot, switch to the jnp.dot path below.)
        def matvec(w, v):
            acc = w[:, 0:1] * v[0:1, :]
            for c in range(1, C):
                acc = acc + w[:, c:c + 1] * v[c:c + 1, :]
            return acc
    else:
        # Larger C: MXU matmul, f32 accumulation.  Kernel stays HBM-bound up to
        # very large C, so the MXU work is hidden under DMA.
        def matvec(w, v):
            return jnp.dot(w, v, preferred_element_type=jnp.float32)

    h = matvec(w1, x) + b1
    h = jnp.where(h >= 0.0, h, 0.1 * h)      # LeakyReLU(negative_slope=0.1)
    return matvec(w2, h) + b2


def _fre_cha_kernel(xr_ref, xi_ref,
                    w1r_ref, b1r_ref, w2r_ref, b2r_ref,
                    w1i_ref, b1i_ref, w2i_ref, b2i_ref,
                    or_ref, oi_ref):
    """Both (real, imag) branches on one lane-dense (C, T) tile per grid step."""
    f32 = jnp.float32
    or_ref[...] = _branch(
        xr_ref[...].astype(f32),
        w1r_ref[...].astype(f32), b1r_ref[...].astype(f32),
        w2r_ref[...].astype(f32), b2r_ref[...].astype(f32),
    ).astype(or_ref.dtype)
    oi_ref[...] = _branch(
        xi_ref[...].astype(f32),
        w1i_ref[...].astype(f32), b1i_ref[...].astype(f32),
        w2i_ref[...].astype(f32), b2i_ref[...].astype(f32),
    ).astype(oi_ref.dtype)


def _choose_tile(C, HW):
    """Adaptive lane tile T (multiple of 128) and padded HW (multiple of T)."""
    c_pad = _round_up(max(C, 1), _SUBLANE)          # VMEM sublane padding
    bytes_per_col = 4 * 2 * c_pad * 4               # (2 in + 2 out) x 2 bufs x f32
    t_cap = (_BLOCK_VMEM_BUDGET // bytes_per_col) // _LANE * _LANE
    t_cap = max(_LANE, min(t_cap, _MAX_T))
    hw128 = _round_up(HW, _LANE)
    T = min(hw128, t_cap)
    hw_pad = _round_up(HW, T)                       # no partial blocks ever
    return T, hw_pad


def _vmem_limit_bytes(C, T):
    """Explicit scoped-VMEM budget from the actual block sizes (+ margin)."""
    c_pad = _round_up(max(C, 1), _SUBLANE)
    blocks = 4 * 2 * c_pad * T * 4                              # x/out, 2-buf
    weights = 4 * 2 * c_pad * _round_up(max(C, 1), _LANE) * 4   # (C,C), 2-buf
    biases = 4 * 2 * _SUBLANE * _LANE * 4                       # (C,1) tiles
    needed = blocks + weights + biases + (2 << 20)              # Mosaic margin
    # Never below the v6e default (32 MiB); never above 48 MiB (v7x has 64 MiB
    # physical per core).  v5e/v6e have 128 MiB physical, so this is always safe.
    return int(min(max(needed, 32 << 20), 48 << 20))


def _run_branches(xr, xi, w1r, b1r, w2r, b2r, w1i, b1i, w2i, b2i, *, T):
    """xr/xi: (N, C, HWp) f32 with HWp % T == 0 -> (out_r, out_i) same shape."""
    N, C, HWp = xr.shape
    grid = (N, HWp // T)

    x_spec = pl.BlockSpec((pl.Squeezed(), C, T), lambda n, t: (n, 0, t))
    w_spec = pl.BlockSpec((C, C), lambda n, t: (0, 0))
    b_spec = pl.BlockSpec((C, 1), lambda n, t: (0, 0))

    out_sds = jax.ShapeDtypeStruct((N, C, HWp), jnp.float32)
    cost = pl.CostEstimate(
        flops=int(8 * C * C * N * HWp),          # 2 branches x 2 layers x 2*C^2
        transcendentals=0,
        bytes_accessed=int(16 * C * N * HWp),    # read + write, real + imag, f32
    )

    return pl.pallas_call(
        _fre_cha_kernel,
        out_shape=(out_sds, out_sds),
        grid_spec=pltpu.PrefetchScalarGridSpec(
            num_scalar_prefetch=0,
            grid=grid,
            in_specs=[x_spec, x_spec,
                      w_spec, b_spec, w_spec, b_spec,
                      w_spec, b_spec, w_spec, b_spec],
            out_specs=[x_spec, x_spec],
        ),
        compiler_params=pltpu.CompilerParams(
            # No reduction axis; all steps independent -> v7x megacore can
            # shard over (N, tiles).
            dimension_semantics=("parallel", "parallel"),
            vmem_limit_bytes=_vmem_limit_bytes(C, T),
        ),
        cost_estimate=cost,
    )(xr, xi, w1r, b1r, w2r, b2r, w1i, b1i, w2i, b2i)


def init_params(key, nc):
    """Deterministic synthetic parameters matching nn.Conv2d(nc, nc, 1) pairs."""
    ks = jax.random.split(key, 8)
    scale = 1.0 / jnp.sqrt(nc)

    def w(k):
        return jax.random.uniform(k, (nc, nc), jnp.float32, -scale, scale)

    def b(k):
        return jax.random.uniform(k, (nc,), jnp.float32, -scale, scale)

    return {
        "w1r": w(ks[0]), "b1r": b(ks[1]), "w2r": w(ks[2]), "b2r": b(ks[3]),
        "w1i": w(ks[4]), "b1i": b(ks[5]), "w2i": w(ks[6]), "b2i": b(ks[7]),
    }


@jax.jit
def fre_block_cha(x_complex, params):
    """Pallas implementation of FreBlockCha.forward.

    x_complex: complex64, shape (N, C, H, W) (NCHW, matching PyTorch)
    returns  : complex64, shape (N, C, H, W)
    """
    N, C, H, W = x_complex.shape
    HW = H * W

    # Real/imag fed as two separate operands into one pallas_call (no stack
    # copy, no (2,...) gather on the way out).  NCHW stays in place: H*W is the
    # lane axis, C the sublane axis, so no transposes anywhere.
    xr = jnp.real(x_complex).reshape(N, C, HW)
    xi = jnp.imag(x_complex).reshape(N, C, HW)

    T, HW_pad = _choose_tile(C, HW)
    if HW_pad != HW:
        # Pad the lane axis so every tile is full-width (lane-dense, unmasked
        # stores); padded columns are computed on garbage-free zeros and
        # sliced off below.
        pad = ((0, 0), (0, 0), (0, HW_pad - HW))
        xr = jnp.pad(xr, pad)
        xi = jnp.pad(xi, pad)

    # Conv2d(nc, nc, 1) weight is (out, in, 1, 1) -> (out, in); y = W @ x uses
    # exactly that orientation, so no transpose.  Biases become (C, 1) columns.
    b1r = params["b1r"].reshape(C, 1)
    b2r = params["b2r"].reshape(C, 1)
    b1i = params["b1i"].reshape(C, 1)
    b2i = params["b2i"].reshape(C, 1)

    out_r, out_i = _run_branches(
        xr, xi,
        params["w1r"], b1r, params["w2r"], b2r,
        params["w1i"], b1i, params["w2i"], b2i,
        T=T)

    out_r = out_r[..., :HW].reshape(N, C, H, W)
    out_i = out_i[..., :HW].reshape(N, C, H, W)
    return jax.lax.complex(out_r, out_i)


def _reference(x_complex, params):
    """Pure-JAX reference mirroring the PyTorch forward (for sanity check)."""
    def branch(a, w1, b1, w2, b2):
        h = jnp.einsum("nchw,oc->nohw", a, w1) + b1.reshape(1, -1, 1, 1)
        h = jnp.where(h >= 0.0, h, 0.1 * h)
        return jnp.einsum("nchw,oc->nohw", h, w2) + b2.reshape(1, -1, 1, 1)

    real = branch(jnp.real(x_complex), params["w1r"], params["b1r"],
                  params["w2r"], params["b2r"])
    imag = branch(jnp.imag(x_complex), params["w1i"], params["b1i"],
                  params["w2i"], params["b2i"])
    return jax.lax.complex(real, imag)


if __name__ == "__main__":
    master = jax.random.PRNGKey(0)

    def run_case(key, N, C, H, W):
        k_r, k_i, k_p = jax.random.split(key, 3)
        x = jax.lax.complex(
            jax.random.normal(k_r, (N, C, H, W), jnp.float32),
            jax.random.normal(k_i, (N, C, H, W), jnp.float32))
        params = init_params(k_p, C)
        out = jax.block_until_ready(fre_block_cha(x, params))
        ref = _reference(x, params)
        assert out.shape == (N, C, H, W) and out.dtype == jnp.complex64
        assert jnp.allclose(out, ref, atol=1e-4, rtol=1e-4), (N, C, H, W)

    keys = jax.random.split(master, 2)
    # Main case: lane-dense (HW = 256 is already a multiple of 128).
    run_case(keys[0], 2, 4, 16, 16)
    # Review correctness concern: HW < 128 and not a multiple of the tile ->
    # exercises the wrapper-side pad/slice path (no partial blocks inside).
    run_case(keys[1], 1, 4, 5, 7)

    print("KERNEL_OK")
</pallas_src>

<mosaic_0001>
module attributes {stable_mosaic.version = 11 : i64} {
  func.func @_fre_cha_kernel(%arg0: i32, %arg1: i32, %arg2: memref<1x4x256xf32, #tpu.memory_space<vmem>>, %arg3: memref<1x4x256xf32, #tpu.memory_space<vmem>>, %arg4: memref<4x4xf32, #tpu.memory_space<vmem>>, %arg5: memref<4x1xf32, #tpu.memory_space<vmem>>, %arg6: memref<4x4xf32, #tpu.memory_space<vmem>>, %arg7: memref<4x1xf32, #tpu.memory_space<vmem>>, %arg8: memref<4x4xf32, #tpu.memory_space<vmem>>, %arg9: memref<4x1xf32, #tpu.memory_space<vmem>>, %arg10: memref<4x4xf32, #tpu.memory_space<vmem>>, %arg11: memref<4x1xf32, #tpu.memory_space<vmem>>, %arg12: memref<1x4x256xf32, #tpu.memory_space<vmem>>, %arg13: memref<1x4x256xf32, #tpu.memory_space<vmem>>) attributes {dimension_semantics = [#tpu.dimension_semantics<parallel>, #tpu.dimension_semantics<parallel>], iteration_bounds = array<i64: 2, 1>, scalar_prefetch = 0 : i64, scratch_operands = 0 : i64, tpu.core_type = #tpu.core_type<tc>, window_params = [{transform_indices = @transform_0, window_bounds = array<i64: 1, 4, 256>}, {transform_indices = @transform_1, window_bounds = array<i64: 1, 4, 256>}, {pipeline_mode = #tpu.pipeline_mode<synchronous>, transform_indices = @transform_2, window_bounds = array<i64: 4, 4>}, {pipeline_mode = #tpu.pipeline_mode<synchronous>, transform_indices = @transform_3, window_bounds = array<i64: 4, 1>}, {pipeline_mode = #tpu.pipeline_mode<synchronous>, transform_indices = @transform_4, window_bounds = array<i64: 4, 4>}, {pipeline_mode = #tpu.pipeline_mode<synchronous>, transform_indices = @transform_5, window_bounds = array<i64: 4, 1>}, {pipeline_mode = #tpu.pipeline_mode<synchronous>, transform_indices = @transform_6, window_bounds = array<i64: 4, 4>}, {pipeline_mode = #tpu.pipeline_mode<synchronous>, transform_indices = @transform_7, window_bounds = array<i64: 4, 1>}, {pipeline_mode = #tpu.pipeline_mode<synchronous>, transform_indices = @transform_8, window_bounds = array<i64: 4, 4>}, {pipeline_mode = #tpu.pipeline_mode<synchronous>, transform_indices = @transform_9, window_bounds = array<i64: 4, 1>}, {transform_indices = @transform_10, window_bounds = array<i64: 1, 4, 256>}, {transform_indices = @transform_11, window_bounds = array<i64: 1, 4, 256>}]} {
    %c0 = arith.constant 0 : index
    %c0_0 = arith.constant 0 : index
    %c0_1 = arith.constant 0 : index
    %0 = vector.load %arg2[%c0, %c0_0, %c0_1] : memref<1x4x256xf32, #tpu.memory_space<vmem>>, vector<1x4x256xf32>
    %1 = vector.shape_cast %0 : vector<1x4x256xf32> to vector<4x256xf32>
    %c0_2 = arith.constant 0 : index
    %c0_3 = arith.constant 0 : index
    %2 = vector.load %arg4[%c0_2, %c0_3] : memref<4x4xf32, #tpu.memory_space<vmem>>, vector<4x4xf32>
    %c0_4 = arith.constant 0 : index
    %c0_5 = arith.constant 0 : index
    %3 = vector.load %arg5[%c0_4, %c0_5] : memref<4x1xf32, #tpu.memory_space<vmem>>, vector<4x1xf32>
    %c0_6 = arith.constant 0 : index
    %c0_7 = arith.constant 0 : index
    %4 = vector.load %arg6[%c0_6, %c0_7] : memref<4x4xf32, #tpu.memory_space<vmem>>, vector<4x4xf32>
    %c0_8 = arith.constant 0 : index
    %c0_9 = arith.constant 0 : index
    %5 = vector.load %arg7[%c0_8, %c0_9] : memref<4x1xf32, #tpu.memory_space<vmem>>, vector<4x1xf32>
    %6 = vector.extract_strided_slice %2 {offsets = [0, 0], sizes = [4, 1], strides = [1, 1]} : vector<4x4xf32> to vector<4x1xf32>
    %7 = vector.extract_strided_slice %1 {offsets = [0, 0], sizes = [1, 256], strides = [1, 1]} : vector<4x256xf32> to vector<1x256xf32>
    %8 = vector.broadcast %6 : vector<4x1xf32> to vector<4x256xf32>
    %9 = vector.broadcast %7 : vector<1x256xf32> to vector<4x256xf32>
    %10 = arith.mulf %8, %9 : vector<4x256xf32>
    %11 = vector.extract_strided_slice %2 {offsets = [0, 1], sizes = [4, 1], strides = [1, 1]} : vector<4x4xf32> to vector<4x1xf32>
    %12 = vector.extract_strided_slice %1 {offsets = [1, 0], sizes = [1, 256], strides = [1, 1]} : vector<4x256xf32> to vector<1x256xf32>
    %13 = vector.broadcast %11 : vector<4x1xf32> to vector<4x256xf32>
    %14 = vector.broadcast %12 : vector<1x256xf32> to vector<4x256xf32>
    %15 = arith.mulf %13, %14 : vector<4x256xf32>
    %16 = arith.addf %10, %15 : vector<4x256xf32>
    %17 = vector.extract_strided_slice %2 {offsets = [0, 2], sizes = [4, 1], strides = [1, 1]} : vector<4x4xf32> to vector<4x1xf32>
    %18 = vector.extract_strided_slice %1 {offsets = [2, 0], sizes = [1, 256], strides = [1, 1]} : vector<4x256xf32> to vector<1x256xf32>
    %19 = vector.broadcast %17 : vector<4x1xf32> to vector<4x256xf32>
    %20 = vector.broadcast %18 : vector<1x256xf32> to vector<4x256xf32>
    %21 = arith.mulf %19, %20 : vector<4x256xf32>
    %22 = arith.addf %16, %21 : vector<4x256xf32>
    %23 = vector.extract_strided_slice %2 {offsets = [0, 3], sizes = [4, 1], strides = [1, 1]} : vector<4x4xf32> to vector<4x1xf32>
    %24 = vector.extract_strided_slice %1 {offsets = [3, 0], sizes = [1, 256], strides = [1, 1]} : vector<4x256xf32> to vector<1x256xf32>
    %25 = vector.broadcast %23 : vector<4x1xf32> to vector<4x256xf32>
    %26 = vector.broadcast %24 : vector<1x256xf32> to vector<4x256xf32>
    %27 = arith.mulf %25, %26 : vector<4x256xf32>
    %28 = arith.addf %22, %27 : vector<4x256xf32>
    %29 = vector.broadcast %3 : vector<4x1xf32> to vector<4x256xf32>
    %30 = arith.addf %28, %29 : vector<4x256xf32>
    %cst = arith.constant 0.000000e+00 : f32
    %31 = vector.broadcast %cst : f32 to vector<4x256xf32>
    %32 = arith.cmpf oge, %30, %31 : vector<4x256xf32>
    %cst_10 = arith.constant 1.000000e-01 : f32
    %33 = vector.broadcast %cst_10 : f32 to vector<4x256xf32>
    %34 = arith.mulf %33, %30 : vector<4x256xf32>
    %35 = arith.select %32, %30, %34 : vector<4x256xi1>, vector<4x256xf32>
    %36 = vector.extract_strided_slice %4 {offsets = [0, 0], sizes = [4, 1], strides = [1, 1]} : vector<4x4xf32> to vector<4x1xf32>
    %37 = vector.extract_strided_slice %35 {offsets = [0, 0], sizes = [1, 256], strides = [1, 1]} : vector<4x256xf32> to vector<1x256xf32>
    %38 = vector.broadcast %36 : vector<4x1xf32> to vector<4x256xf32>
    %39 = vector.broadcast %37 : vector<1x256xf32> to vector<4x256xf32>
    %40 = arith.mulf %38, %39 : vector<4x256xf32>
    %41 = vector.extract_strided_slice %4 {offsets = [0, 1], sizes = [4, 1], strides = [1, 1]} : vector<4x4xf32> to vector<4x1xf32>
    %42 = vector.extract_strided_slice %35 {offsets = [1, 0], sizes = [1, 256], strides = [1, 1]} : vector<4x256xf32> to vector<1x256xf32>
    %43 = vector.broadcast %41 : vector<4x1xf32> to vector<4x256xf32>
    %44 = vector.broadcast %42 : vector<1x256xf32> to vector<4x256xf32>
    %45 = arith.mulf %43, %44 : vector<4x256xf32>
    %46 = arith.addf %40, %45 : vector<4x256xf32>
    %47 = vector.extract_strided_slice %4 {offsets = [0, 2], sizes = [4, 1], strides = [1, 1]} : vector<4x4xf32> to vector<4x1xf32>
    %48 = vector.extract_strided_slice %35 {offsets = [2, 0], sizes = [1, 256], strides = [1, 1]} : vector<4x256xf32> to vector<1x256xf32>
    %49 = vector.broadcast %47 : vector<4x1xf32> to vector<4x256xf32>
    %50 = vector.broadcast %48 : vector<1x256xf32> to vector<4x256xf32>
    %51 = arith.mulf %49, %50 : vector<4x256xf32>
    %52 = arith.addf %46, %51 : vector<4x256xf32>
    %53 = vector.extract_strided_slice %4 {offsets = [0, 3], sizes = [4, 1], strides = [1, 1]} : vector<4x4xf32> to vector<4x1xf32>
    %54 = vector.extract_strided_slice %35 {offsets = [3, 0], sizes = [1, 256], strides = [1, 1]} : vector<4x256xf32> to vector<1x256xf32>
    %55 = vector.broadcast %53 : vector<4x1xf32> to vector<4x256xf32>
    %56 = vector.broadcast %54 : vector<1x256xf32> to vector<4x256xf32>
    %57 = arith.mulf %55, %56 : vector<4x256xf32>
    %58 = arith.addf %52, %57 : vector<4x256xf32>
    %59 = vector.broadcast %5 : vector<4x1xf32> to vector<4x256xf32>
    %60 = arith.addf %58, %59 : vector<4x256xf32>
    %c0_11 = arith.constant 0 : index
    %c0_12 = arith.constant 0 : index
    %c0_13 = arith.constant 0 : index
    %61 = vector.load %arg12[%c0_11, %c0_12, %c0_13] : memref<1x4x256xf32, #tpu.memory_space<vmem>>, vector<1x4x256xf32>
    %62 = vector.shape_cast %61 : vector<1x4x256xf32> to vector<4x256xf32>
    %63 = vector.shape_cast %60 : vector<4x256xf32> to vector<1x4x256xf32>
    tpu.vector_store %arg12[%c0_11, %c0_12, %c0_13], %63 {strides = array<i32>} : memref<1x4x256xf32, #tpu.memory_space<vmem>>, vector<1x4x256xf32>,
    %c0_14 = arith.constant 0 : index
    %c0_15 = arith.constant 0 : index
    %c0_16 = arith.constant 0 : index
    %64 = vector.load %arg3[%c0_14, %c0_15, %c0_16] : memref<1x4x256xf32, #tpu.memory_space<vmem>>, vector<1x4x256xf32>
    %65 = vector.shape_cast %64 : vector<1x4x256xf32> to vector<4x256xf32>
    %c0_17 = arith.constant 0 : index
    %c0_18 = arith.constant 0 : index
    %66 = vector.load %arg8[%c0_17, %c0_18] : memref<4x4xf32, #tpu.memory_space<vmem>>, vector<4x4xf32>
    %c0_19 = arith.constant 0 : index
    %c0_20 = arith.constant 0 : index
    %67 = vector.load %arg9[%c0_19, %c0_20] : memref<4x1xf32, #tpu.memory_space<vmem>>, vector<4x1xf32>
    %c0_21 = arith.constant 0 : index
    %c0_22 = arith.constant 0 : index
    %68 = vector.load %arg10[%c0_21, %c0_22] : memref<4x4xf32, #tpu.memory_space<vmem>>, vector<4x4xf32>
    %c0_23 = arith.constant 0 : index
    %c0_24 = arith.constant 0 : index
    %69 = vector.load %arg11[%c0_23, %c0_24] : memref<4x1xf32, #tpu.memory_space<vmem>>, vector<4x1xf32>
    %70 = vector.extract_strided_slice %66 {offsets = [0, 0], sizes = [4, 1], strides = [1, 1]} : vector<4x4xf32> to vector<4x1xf32>
    %71 = vector.extract_strided_slice %65 {offsets = [0, 0], sizes = [1, 256], strides = [1, 1]} : vector<4x256xf32> to vector<1x256xf32>
    %72 = vector.broadcast %70 : vector<4x1xf32> to vector<4x256xf32>
    %73 = vector.broadcast %71 : vector<1x256xf32> to vector<4x256xf32>
    %74 = arith.mulf %72, %73 : vector<4x256xf32>
    %75 = vector.extract_strided_slice %66 {offsets = [0, 1], sizes = [4, 1], strides = [1, 1]} : vector<4x4xf32> to vector<4x1xf32>
    %76 = vector.extract_strided_slice %65 {offsets = [1, 0], sizes = [1, 256], strides = [1, 1]} : vector<4x256xf32> to vector<1x256xf32>
    %77 = vector.broadcast %75 : vector<4x1xf32> to vector<4x256xf32>
    %78 = vector.broadcast %76 : vector<1x256xf32> to vector<4x256xf32>
    %79 = arith.mulf %77, %78 : vector<4x256xf32>
    %80 = arith.addf %74, %79 : vector<4x256xf32>
    %81 = vector.extract_strided_slice %66 {offsets = [0, 2], sizes = [4, 1], strides = [1, 1]} : vector<4x4xf32> to vector<4x1xf32>
    %82 = vector.extract_strided_slice %65 {offsets = [2, 0], sizes = [1, 256], strides = [1, 1]} : vector<4x256xf32> to vector<1x256xf32>
    %83 = vector.broadcast %81 : vector<4x1xf32> to vector<4x256xf32>
    %84 = vector.broadcast %82 : vector<1x256xf32> to vector<4x256xf32>
    %85 = arith.mulf %83, %84 : vector<4x256xf32>
    %86 = arith.addf %80, %85 : vector<4x256xf32>
    %87 = vector.extract_strided_slice %66 {offsets = [0, 3], sizes = [4, 1], strides = [1, 1]} : vector<4x4xf32> to vector<4x1xf32>
    %88 = vector.extract_strided_slice %65 {offsets = [3, 0], sizes = [1, 256], strides = [1, 1]} : vector<4x256xf32> to vector<1x256xf32>
    %89 = vector.broadcast %87 : vector<4x1xf32> to vector<4x256xf32>
    %90 = vector.broadcast %88 : vector<1x256xf32> to vector<4x256xf32>
    %91 = arith.mulf %89, %90 : vector<4x256xf32>
    %92 = arith.addf %86, %91 : vector<4x256xf32>
    %93 = vector.broadcast %67 : vector<4x1xf32> to vector<4x256xf32>
    %94 = arith.addf %92, %93 : vector<4x256xf32>
    %cst_25 = arith.constant 0.000000e+00 : f32
    %95 = vector.broadcast %cst_25 : f32 to vector<4x256xf32>
    %96 = arith.cmpf oge, %94, %95 : vector<4x256xf32>
    %cst_26 = arith.constant 1.000000e-01 : f32
    %97 = vector.broadcast %cst_26 : f32 to vector<4x256xf32>
    %98 = arith.mulf %97, %94 : vector<4x256xf32>
    %99 = arith.select %96, %94, %98 : vector<4x256xi1>, vector<4x256xf32>
    %100 = vector.extract_strided_slice %68 {offsets = [0, 0], sizes = [4, 1], strides = [1, 1]} : vector<4x4xf32> to vector<4x1xf32>
    %101 = vector.extract_strided_slice %99 {offsets = [0, 0], sizes = [1, 256], strides = [1, 1]} : vector<4x256xf32> to vector<1x256xf32>
    %102 = vector.broadcast %100 : vector<4x1xf32> to vector<4x256xf32>
    %103 = vector.broadcast %101 : vector<1x256xf32> to vector<4x256xf32>
    %104 = arith.mulf %102, %103 : vector<4x256xf32>
    %105 = vector.extract_strided_slice %68 {offsets = [0, 1], sizes = [4, 1], strides = [1, 1]} : vector<4x4xf32> to vector<4x1xf32>
    %106 = vector.extract_strided_slice %99 {offsets = [1, 0], sizes = [1, 256], strides = [1, 1]} : vector<4x256xf32> to vector<1x256xf32>
    %107 = vector.broadcast %105 : vector<4x1xf32> to vector<4x256xf32>
    %108 = vector.broadcast %106 : vector<1x256xf32> to vector<4x256xf32>
    %109 = arith.mulf %107, %108 : vector<4x256xf32>
    %110 = arith.addf %104, %109 : vector<4x256xf32>
    %111 = vector.extract_strided_slice %68 {offsets = [0, 2], sizes = [4, 1], strides = [1, 1]} : vector<4x4xf32> to vector<4x1xf32>
    %112 = vector.extract_strided_slice %99 {offsets = [2, 0], sizes = [1, 256], strides = [1, 1]} : vector<4x256xf32> to vector<1x256xf32>
    %113 = vector.broadcast %111 : vector<4x1xf32> to vector<4x256xf32>
    %114 = vector.broadcast %112 : vector<1x256xf32> to vector<4x256xf32>
    %115 = arith.mulf %113, %114 : vector<4x256xf32>
    %116 = arith.addf %110, %115 : vector<4x256xf32>
    %117 = vector.extract_strided_slice %68 {offsets = [0, 3], sizes = [4, 1], strides = [1, 1]} : vector<4x4xf32> to vector<4x1xf32>
    %118 = vector.extract_strided_slice %99 {offsets = [3, 0], sizes = [1, 256], strides = [1, 1]} : vector<4x256xf32> to vector<1x256xf32>
    %119 = vector.broadcast %117 : vector<4x1xf32> to vector<4x256xf32>
    %120 = vector.broadcast %118 : vector<1x256xf32> to vector<4x256xf32>
    %121 = arith.mulf %119, %120 : vector<4x256xf32>
    %122 = arith.addf %116, %121 : vector<4x256xf32>
    %123 = vector.broadcast %69 : vector<4x1xf32> to vector<4x256xf32>
    %124 = arith.addf %122, %123 : vector<4x256xf32>
    %c0_27 = arith.constant 0 : index
    %c0_28 = arith.constant 0 : index
    %c0_29 = arith.constant 0 : index
    %125 = vector.load %arg13[%c0_27, %c0_28, %c0_29] : memref<1x4x256xf32, #tpu.memory_space<vmem>>, vector<1x4x256xf32>
    %126 = vector.shape_cast %125 : vector<1x4x256xf32> to vector<4x256xf32>
    %127 = vector.shape_cast %124 : vector<4x256xf32> to vector<1x4x256xf32>
    tpu.vector_store %arg13[%c0_27, %c0_28, %c0_29], %127 {strides = array<i32>} : memref<1x4x256xf32, #tpu.memory_space<vmem>>, vector<1x4x256xf32>,
    return
  }
  func.func @transform_0(%arg0: i32, %arg1: i32) -> (i32, i32, i32) {
    %c0_i32 = arith.constant 0 : i32
    %c0_i32_0 = arith.constant 0 : i32
    return %arg0, %c0_i32, %arg1 : i32, i32, i32
  }
  func.func @transform_1(%arg0: i32, %arg1: i32) -> (i32, i32, i32) {
    %c0_i32 = arith.constant 0 : i32
    %c0_i32_0 = arith.constant 0 : i32
    return %arg0, %c0_i32, %arg1 : i32, i32, i32
  }
  func.func @transform_2(%arg0: i32, %arg1: i32) -> (i32, i32) {
    %c0_i32 = arith.constant 0 : i32
    %c0_i32_0 = arith.constant 0 : i32
    %c0_i32_1 = arith.constant 0 : i32
    return %c0_i32, %c0_i32_0 : i32, i32
  }
  func.func @transform_3(%arg0: i32, %arg1: i32) -> (i32, i32) {
    %c0_i32 = arith.constant 0 : i32
    %c0_i32_0 = arith.constant 0 : i32
    %c0_i32_1 = arith.constant 0 : i32
    return %c0_i32, %c0_i32_0 : i32, i32
  }
  func.func @transform_4(%arg0: i32, %arg1: i32) -> (i32, i32) {
    %c0_i32 = arith.constant 0 : i32
    %c0_i32_0 = arith.constant 0 : i32
    %c0_i32_1 = arith.constant 0 : i32
    return %c0_i32, %c0_i32_0 : i32, i32
  }
  func.func @transform_5(%arg0: i32, %arg1: i32) -> (i32, i32) {
    %c0_i32 = arith.constant 0 : i32
    %c0_i32_0 = arith.constant 0 : i32
    %c0_i32_1 = arith.constant 0 : i32
    return %c0_i32, %c0_i32_0 : i32, i32
  }
  func.func @transform_6(%arg0: i32, %arg1: i32) -> (i32, i32) {
    %c0_i32 = arith.constant 0 : i32
    %c0_i32_0 = arith.constant 0 : i32
    %c0_i32_1 = arith.constant 0 : i32
    return %c0_i32, %c0_i32_0 : i32, i32
  }
  func.func @transform_7(%arg0: i32, %arg1: i32) -> (i32, i32) {
    %c0_i32 = arith.constant 0 : i32
    %c0_i32_0 = arith.constant 0 : i32
    %c0_i32_1 = arith.constant 0 : i32
    return %c0_i32, %c0_i32_0 : i32, i32
  }
  func.func @transform_8(%arg0: i32, %arg1: i32) -> (i32, i32) {
    %c0_i32 = arith.constant 0 : i32
    %c0_i32_0 = arith.constant 0 : i32
    %c0_i32_1 = arith.constant 0 : i32
    return %c0_i32, %c0_i32_0 : i32, i32
  }
  func.func @transform_9(%arg0: i32, %arg1: i32) -> (i32, i32) {
    %c0_i32 = arith.constant 0 : i32
    %c0_i32_0 = arith.constant 0 : i32
    %c0_i32_1 = arith.constant 0 : i32
    return %c0_i32, %c0_i32_0 : i32, i32
  }
  func.func @transform_10(%arg0: i32, %arg1: i32) -> (i32, i32, i32) {
    %c0_i32 = arith.constant 0 : i32
    %c0_i32_0 = arith.constant 0 : i32
    return %arg0, %c0_i32, %arg1 : i32, i32, i32
  }
  func.func @transform_11(%arg0: i32, %arg1: i32) -> (i32, i32, i32) {
    %c0_i32 = arith.constant 0 : i32
    %c0_i32_0 = arith.constant 0 : i32
    return %arg0, %c0_i32, %arg1 : i32, i32, i32
  }
}

</mosaic_0001>

<llo_original>
// kernel: custom-call
$region0: #{custom-call}
  %s0 = inlined_call_operand.hbm [shape: c64[2,4,16,16], index: 0, kind: input, shape index: {}]
  %s1 = inlined_call_operand.vmem [shape: f32[2,4,16,16], index: 1, kind: output, shape index: {}]
  $region1: #{custom-call} parent=0
    #allocation0 [shape = 's32[1]{0}', space=sflag, size = 0x4, scoped, tag = 'scoped memory for custom-call']
    %2 = vsyncpa [#allocation0], 0
    %s3 = sshll.u32 %s1, 4
    %s4 = int_to_ptr.vmem [resolvable:$true] %s3
    %6 = dma.hbm_to_vmem [thread:$0]  %s0, 2048, %s4, [#allocation0]
    %7 = dma.done [#allocation0], 2048
    %8 = vsyncpa [#allocation0], 1

// kernel: custom-call.1
$region0: #{custom-call.1}
  %s0 = inlined_call_operand.hbm [shape: c64[2,4,16,16], index: 0, kind: input, shape index: {}]
  %s1 = inlined_call_operand.vmem [shape: f32[2,4,16,16], index: 1, kind: output, shape index: {}]
  %s2 = scalar_lea.hbm %s0, 2048
  $region1: #{custom-call.1} parent=0
    #allocation0 [shape = 's32[1]{0}', space=sflag, size = 0x4, scoped, tag = 'scoped memory for custom-call.1']
    %3 = vsyncpa [#allocation0], 0
    %s4 = sshll.u32 %s1, 4
    %s5 = int_to_ptr.vmem [resolvable:$true] %s4
    %7 = dma.hbm_to_vmem [thread:$0]  %s2, 2048, %s5, [#allocation0]
    %8 = dma.done [#allocation0], 2048
    %9 = vsyncpa [#allocation0], 1

// kernel: custom-call.2
$region0: #{custom-call.2}
  %s0 = inlined_call_operand.vmem [shape: f32[2,4,16,16], index: 0, kind: input, shape index: {}]
  %s1 = inlined_call_operand.vmem [shape: f32[2,4,16,16], index: 1, kind: input, shape index: {}]
  %s2 = inlined_call_operand.hbm [shape: c64[2,4,16,16], index: 2, kind: output, shape index: {}]
  %s3 = scalar_lea.hbm %s2, 2048
  $region1: #{custom-call.2} parent=0
    #allocation0 [shape = 's32[1]{0}', space=sflag, size = 0x4, scoped, tag = 'scoped memory for custom-call.2']
    %4 = vsyncpa [#allocation0], 0
    %s5 = sshll.u32 %s0, 4
    %s6 = int_to_ptr.vmem [resolvable:$true] %s5
    %8 = dma.vmem_to_hbm [thread:$0]  %s6, 2048, %s2, [#allocation0]
    %9 = dma.done [#allocation0], 2048
    %10 = vsyncpa [#allocation0], 1
  $region2: #{custom-call.2} parent=0
    #allocation1 [shape = 's32[1]{0}', space=sflag, size = 0x4, scoped, tag = 'scoped memory for custom-call.2']
    %11 = vsyncpa [#allocation1], 0
    %s12 = sshll.u32 %s1, 4
    %s13 = int_to_ptr.vmem [resolvable:$true] %s12
    %15 = dma.vmem_to_hbm [thread:$0]  %s13, 2048, %s3, [#allocation1]
    %16 = dma.done [#allocation1], 2048
    %17 = vsyncpa [#allocation1], 1

// kernel: fre_block_cha.1
$region0: #{fre_block_cha.1}
  #allocation0 [shape = 'u32[]', space=smem, size = 0x4, offset = 0x4, fixed_abs, tag = 'smem constant byte address 0x4 - core index']
  #allocation1 [shape = 'u32[144,128]{1,0:T(1,128)}', space=vmem, size = 0x12000, scoped, tag = 'internal scratch']
  %s0 = inlined_call_operand.vmem [shape: f32[2,4,256], index: 0, kind: input, shape index: {}]
  %s1 = inlined_call_operand.vmem [shape: f32[2,4,256], index: 1, kind: input, shape index: {}]
  %s2 = inlined_call_operand.vmem [shape: f32[4,4], index: 2, kind: input, shape index: {}]
  %s3 = inlined_call_operand.vmem [shape: f32[4,1], index: 3, kind: input, shape index: {}]
  %s4 = inlined_call_operand.vmem [shape: f32[4,4], index: 4, kind: input, shape index: {}]
  %s5 = inlined_call_operand.vmem [shape: f32[4,1], index: 5, kind: input, shape index: {}]
  %s6 = inlined_call_operand.vmem [shape: f32[4,4], index: 6, kind: input, shape index: {}]
  %s7 = inlined_call_operand.vmem [shape: f32[4,1], index: 7, kind: input, shape index: {}]
  %s8 = inlined_call_operand.vmem [shape: f32[4,4], index: 8, kind: input, shape index: {}]
  %s9 = inlined_call_operand.vmem [shape: f32[4,1], index: 9, kind: input, shape index: {}]
  %s10 = inlined_call_operand.vmem [shape: f32[2,4,256], index: 10, kind: output, shape index: {0}]
  %s11 = inlined_call_operand.vmem [shape: f32[2,4,256], index: 11, kind: output, shape index: {1}]
  %12 = xla_tuple %s10, %s11
  %s13 = sld [smem:[#allocation0]]
  $region81: #{fre_block_cha.1} parent=0
    _
  %s15 = ssub.s32 1, %s13
  %s16 = scalar_select 0, %s15, %s13
  loop: start=0, step=1, limit=4
  $region2: #{fre_block_cha.1} parent=0 // loop_pre_header
    _
  $region3: #{fre_block_cha.1} parent=0 // loop_header
    %s18 = sphi 0, %s22
    %p19 = scmp.ge.s32.totalorder %s18, 4
    %s25 = sphi 0, %s37
    %s26 = sphi 0, %s33
    %s27 = sphi 0, %s25
    %s28 = sphi 0, %s26
    %s29 = sphi 0, %s27
    %s30 = sphi 0, %s28
    %s42 = sphi 0, %s44
    %s45 = sphi 0, %s42
    %s46 = sphi 0, %s45
    %s62 = sphi 0, %s46
    %s70 = sphi 0, %s72
    %s73 = sphi 0, %s70
    %s74 = sphi 0, %s73
    %s90 = sphi 0, %s74
    %s94 = sphi 0, %s94
    %s96 = sphi 0, %s94
    %s97 = sphi 0, %s96
    %s111 = sphi 0, %s97
    %s115 = sphi 0, %s115
    %s117 = sphi 0, %s115
    %s118 = sphi 0, %s117
    %s132 = sphi 0, %s118
    %s136 = sphi 0, %s136
    %s138 = sphi 0, %s136
    %s139 = sphi 0, %s138
    %s153 = sphi 0, %s139
    %s157 = sphi 0, %s157
    %s159 = sphi 0, %s157
    %s160 = sphi 0, %s159
    %s174 = sphi 0, %s160
    %s178 = sphi 0, %s178
    %s180 = sphi 0, %s178
    %s181 = sphi 0, %s180
    %s195 = sphi 0, %s181
    %s199 = sphi 0, %s199
    %s201 = sphi 0, %s199
    %s202 = sphi 0, %s201
    %s216 = sphi 0, %s202
    %s220 = sphi 0, %s220
    %s222 = sphi 0, %s220
    %s223 = sphi 0, %s222
    %s237 = sphi 0, %s223
    %s241 = sphi 0, %s241
    %s243 = sphi 0, %s241
    %s244 = sphi 0, %s243
    %s258 = sphi 0, %s244
    %s266 = sphi 0, %s268
    %s269 = sphi 0, %s266
    %s270 = sphi 0, %s269
    %s286 = sphi 0, %s270
    %s294 = sphi 0, %s296
    %s297 = sphi 0, %s294
    %s298 = sphi 0, %s297
    %s314 = sphi 0, %s298
  $region4: #{fre_block_cha.1} parent=0 // loop_header_branch
    %21 = sbr.rel (%p19) target = $region8
  $region5: #{fre_block_cha.1} parent=0 // loop_body
    %s23 = ssub.s32 %s18, 1
    %s24 = ssub.s32 %s18, 2
    %s31 = sadd.s32 1, %s26
    %p32 = scmp.ge.s32.totalorder %s31, 1
    %s33 = scalar_select %p32, 0, %s31
    %s34 = sadd.s32 1, %s25
    %s35 = scalar_select %p32, %s34, %s25
    %p36 = scmp.ge.s32.totalorder %s35, 2
    %s37 = scalar_select %p36, 0, %s35
    %s38 = ssub.s32 %s25, %s37
    %s39 = ssub.s32 %s26, %s33
    %s40 = sor.u32 %s38, %s39
    %p41 = scmp.eq.s32.totalorder %s40, 0
    %s43 = sadd.s32 %s42, 1
    %s44 = scalar_select %p41, %s42, %s43
    %p47 = pneg %p41
    %p48 = scmp.eq.s32.totalorder %s18, 1
    %p49 = por %p47, %p48
    %p50 = scmp.ne.s32.totalorder %s42, %s45
    %p51 = scmp.eq.s32.totalorder %s18, 0
    %p52 = por %p50, %p51
    %p53 = scmp.ne.s32.totalorder %s42, %s45
    %p54 = scmp.eq.s32.totalorder %s23, 1
    %p55 = por %p53, %p54
    %p56 = scmp.ne.s32.totalorder %s45, %s46
    %p57 = scmp.eq.s32.totalorder %s23, 0
    %p58 = por %p56, %p57
    %p59 = scmp.ne.s32.totalorder %s45, %s46
    %p60 = scmp.eq.s32.totalorder %s24, 1
    %p61 = por %p59, %p60
    %p63 = scmp.ne.s32.totalorder %s46, %s62
    %p64 = scmp.eq.s32.totalorder %s24, 0
    %p65 = por %p63, %p64
    %s66 = ssub.s32 %s25, %s37
    %s67 = ssub.s32 %s26, %s33
    %s68 = sor.u32 %s66, %s67
    %p69 = scmp.eq.s32.totalorder %s68, 0
    %s71 = sadd.s32 %s70, 1
    %s72 = scalar_select %p69, %s70, %s71
    %p75 = pneg %p69
    %p76 = scmp.eq.s32.totalorder %s18, 1
    %p77 = por %p75, %p76
    %p78 = scmp.ne.s32.totalorder %s70, %s73
    %p79 = scmp.eq.s32.totalorder %s18, 0
    %p80 = por %p78, %p79
    %p81 = scmp.ne.s32.totalorder %s70, %s73
    %p82 = scmp.eq.s32.totalorder %s23, 1
    %p83 = por %p81, %p82
    %p84 = scmp.ne.s32.totalorder %s73, %s74
    %p85 = scmp.eq.s32.totalorder %s23, 0
    %p86 = por %p84, %p85
    %p87 = scmp.ne.s32.totalorder %s73, %s74
    %p88 = scmp.eq.s32.totalorder %s24, 1
    %p89 = por %p87, %p88
    %p91 = scmp.ne.s32.totalorder %s74, %s90
    %p92 = scmp.eq.s32.totalorder %s24, 0
    %p93 = por %p91, %p92
    %s95 = sadd.s32 %s94, 1
    %p98 = scmp.eq.s32.totalorder %s18, 1
    %p99 = scmp.ne.s32.totalorder %s94, %s96
    %p100 = scmp.eq.s32.totalorder %s18, 0
    %p101 = por %p99, %p100
    %p102 = scmp.ne.s32.totalorder %s94, %s96
    %p103 = scmp.eq.s32.totalorder %s23, 1
    %p104 = por %p102, %p103
    %p105 = scmp.ne.s32.totalorder %s96, %s97
    %p106 = scmp.eq.s32.totalorder %s23, 0
    %p107 = por %p105, %p106
    %p108 = scmp.ne.s32.totalorder %s96, %s97
    %p109 = scmp.eq.s32.totalorder %s24, 1
    %p110 = por %p108, %p109
    %p112 = scmp.ne.s32.totalorder %s97, %s111
    %p113 = scmp.eq.s32.totalorder %s24, 0
    %p114 = por %p112, %p113
    %s116 = sadd.s32 %s115, 1
    %p119 = scmp.eq.s32.totalorder %s18, 1
    %p120 = scmp.ne.s32.totalorder %s115, %s117
    %p121 = scmp.eq.s32.totalorder %s18, 0
    %p122 = por %p120, %p121
    %p123 = scmp.ne.s32.totalorder %s115, %s117
    %p124 = scmp.eq.s32.totalorder %s23, 1
    %p125 = por %p123, %p124
    %p126 = scmp.ne.s32.totalorder %s117, %s118
    %p127 = scmp.eq.s32.totalorder %s23, 0
    %p128 = por %p126, %p127
    %p129 = scmp.ne.s32.totalorder %s117, %s118
    %p130 = scmp.eq.s32.totalorder %s24, 1
    %p131 = por %p129, %p130
    %p133 = scmp.ne.s32.totalorder %s118, %s132
    %p134 = scmp.eq.s32.totalorder %s24, 0
    %p135 = por %p133, %p134
    %s137 = sadd.s32 %s136, 1
    %p140 = scmp.eq.s32.totalorder %s18, 1
    %p141 = scmp.ne.s32.totalorder %s136, %s138
    %p142 = scmp.eq.s32.totalorder %s18, 0
    %p143 = por %p141, %p142
    %p144 = scmp.ne.s32.totalorder %s136, %s138
    %p145 = scmp.eq.s32.totalorder %s23, 1
    %p146 = por %p144, %p145
    %p147 = scmp.ne.s32.totalorder %s138, %s139
    %p148 = scmp.eq.s32.totalorder %s23, 0
    %p149 = por %p147, %p148
    %p150 = scmp.ne.s32.totalorder %s138, %s139
    %p151 = scmp.eq.s32.totalorder %s24, 1
    %p152 = por %p150, %p151
    %p154 = scmp.ne.s32.totalorder %s139, %s153
    %p155 = scmp.eq.s32.totalorder %s24, 0
    %p156 = por %p154, %p155
    %s158 = sadd.s32 %s157, 1
    %p161 = scmp.eq.s32.totalorder %s18, 1
    %p162 = scmp.ne.s32.totalorder %s157, %s159
    %p163 = scmp.eq.s32.totalorder %s18, 0
    %p164 = por %p162, %p163
    %p165 = scmp.ne.s32.totalorder %s157, %s159
    %p166 = scmp.eq.s32.totalorder %s23, 1
    %p167 = por %p165, %p166
    %p168 = scmp.ne.s32.totalorder %s159, %s160
    %p169 = scmp.eq.s32.totalorder %s23, 0
    %p170 = por %p168, %p169
    %p171 = scmp.ne.s32.totalorder %s159, %s160
    %p172 = scmp.eq.s32.totalorder %s24, 1
    %p173 = por %p171, %p172
    %p175 = scmp.ne.s32.totalorder %s160, %s174
    %p176 = scmp.eq.s32.totalorder %s24, 0
    %p177 = por %p175, %p176
    %s179 = sadd.s32 %s178, 1
    %p182 = scmp.eq.s32.totalorder %s18, 1
    %p183 = scmp.ne.s32.totalorder %s178, %s180
    %p184 = scmp.eq.s32.totalorder %s18, 0
    %p185 = por %p183, %p184
    %p186 = scmp.ne.s32.totalorder %s178, %s180
    %p187 = scmp.eq.s32.totalorder %s23, 1
    %p188 = por %p186, %p187
    %p189 = scmp.ne.s32.totalorder %s180, %s181
    %p190 = scmp.eq.s32.totalorder %s23, 0
    %p191 = por %p189, %p190
    %p192 = scmp.ne.s32.totalorder %s180, %s181
    %p193 = scmp.eq.s32.totalorder %s24, 1
    %p194 = por %p192, %p193
    %p196 = scmp.ne.s32.totalorder %s181, %s195
    %p197 = scmp.eq.s32.totalorder %s24, 0
    %p198 = por %p196, %p197
    %s200 = sadd.s32 %s199, 1
    %p203 = scmp.eq.s32.totalorder %s18, 1
    %p204 = scmp.ne.s32.totalorder %s199, %s201
    %p205 = scmp.eq.s32.totalorder %s18, 0
    %p206 = por %p204, %p205
    %p207 = scmp.ne.s32.totalorder %s199, %s201
    %p208 = scmp.eq.s32.totalorder %s23, 1
    %p209 = por %p207, %p208
    %p210 = scmp.ne.s32.totalorder %s201, %s202
    %p211 = scmp.eq.s32.totalorder %s23, 0
    %p212 = por %p210, %p211
    %p213 = scmp.ne.s32.totalorder %s201, %s202
    %p214 = scmp.eq.s32.totalorder %s24, 1
    %p215 = por %p213, %p214
    %p217 = scmp.ne.s32.totalorder %s202, %s216
    %p218 = scmp.eq.s32.totalorder %s24, 0
    %p219 = por %p217, %p218
    %s221 = sadd.s32 %s220, 1
    %p224 = scmp.eq.s32.totalorder %s18, 1
    %p225 = scmp.ne.s32.totalorder %s220, %s222
    %p226 = scmp.eq.s32.totalorder %s18, 0
    %p227 = por %p225, %p226
    %p228 = scmp.ne.s32.totalorder %s220, %s222
    %p229 = scmp.eq.s32.totalorder %s23, 1
    %p230 = por %p228, %p229
    %p231 = scmp.ne.s32.totalorder %s222, %s223
    %p232 = scmp.eq.s32.totalorder %s23, 0
    %p233 = por %p231, %p232
    %p234 = scmp.ne.s32.totalorder %s222, %s223
    %p235 = scmp.eq.s32.totalorder %s24, 1
    %p236 = por %p234, %p235
    %p238 = scmp.ne.s32.totalorder %s223, %s237
    %p239 = scmp.eq.s32.totalorder %s24, 0
    %p240 = por %p238, %p239
    %s242 = sadd.s32 %s241, 1
    %p245 = scmp.eq.s32.totalorder %s18, 1
    %p246 = scmp.ne.s32.totalorder %s241, %s243
    %p247 = scmp.eq.s32.totalorder %s18, 0
    %p248 = por %p246, %p247
    %p249 = scmp.ne.s32.totalorder %s241, %s243
    %p250 = scmp.eq.s32.totalorder %s23, 1
    %p251 = por %p249, %p250
    %p252 = scmp.ne.s32.totalorder %s243, %s244
    %p253 = scmp.eq.s32.totalorder %s23, 0
    %p254 = por %p252, %p253
    %p255 = scmp.ne.s32.totalorder %s243, %s244
    %p256 = scmp.eq.s32.totalorder %s24, 1
    %p257 = por %p255, %p256
    %p259 = scmp.ne.s32.totalorder %s244, %s258
    %p260 = scmp.eq.s32.totalorder %s24, 0
    %p261 = por %p259, %p260
    %s262 = ssub.s32 %s25, %s37
    %s263 = ssub.s32 %s26, %s33
    %s264 = sor.u32 %s262, %s263
    %p265 = scmp.eq.s32.totalorder %s264, 0
    %s267 = sadd.s32 %s266, 1
    %s268 = scalar_select %p265, %s266, %s267
    %p271 = pneg %p265
    %p272 = scmp.eq.s32.totalorder %s18, 1
    %p273 = por %p271, %p272
    %p274 = scmp.ne.s32.totalorder %s266, %s269
    %p275 = scmp.eq.s32.totalorder %s18, 0
    %p276 = por %p274, %p275
    %p277 = scmp.ne.s32.totalorder %s266, %s269
    %p278 = scmp.eq.s32.totalorder %s23, 1
    %p279 = por %p277, %p278
    %p280 = scmp.ne.s32.totalorder %s269, %s270
    %p281 = scmp.eq.s32.totalorder %s23, 0
    %p282 = por %p280, %p281
    %p283 = scmp.ne.s32.totalorder %s269, %s270
    %p284 = scmp.eq.s32.totalorder %s24, 1
    %p285 = por %p283, %p284
    %p287 = scmp.ne.s32.totalorder %s270, %s286
    %p288 = scmp.eq.s32.totalorder %s24, 0
    %p289 = por %p287, %p288
    %s290 = ssub.s32 %s25, %s37
    %s291 = ssub.s32 %s26, %s33
    %s292 = sor.u32 %s290, %s291
    %p293 = scmp.eq.s32.totalorder %s292, 0
    %s295 = sadd.s32 %s294, 1
    %s296 = scalar_select %p293, %s294, %s295
    %p299 = pneg %p293
    %p300 = scmp.eq.s32.totalorder %s18, 1
    %p301 = por %p299, %p300
    %p302 = scmp.ne.s32.totalorder %s294, %s297
    %p303 = scmp.eq.s32.totalorder %s18, 0
    %p304 = por %p302, %p303
    %p305 = scmp.ne.s32.totalorder %s294, %s297
    %p306 = scmp.eq.s32.totalorder %s23, 1
    %p307 = por %p305, %p306
    %p308 = scmp.ne.s32.totalorder %s297, %s298
    %p309 = scmp.eq.s32.totalorder %s23, 0
    %p310 = por %p308, %p309
    %p311 = scmp.ne.s32.totalorder %s297, %s298
    %p312 = scmp.eq.s32.totalorder %s24, 1
    %p313 = por %p311, %p312
    %p315 = scmp.ne.s32.totalorder %s298, %s314
    %p316 = scmp.eq.s32.totalorder %s24, 0
    %p317 = por %p315, %p316
    %p318 = scmp.le.s32.totalorder 1, %s18
    %p319 = scmp.lt.s32.totalorder %s18, 3
    %p320 = pnand %p318, %p319
    %p321 = pneg %p320
    // Predicated region
    $region9: #{fre_block_cha.1} parent=5 // pred_check
      _
    $region10: #{fre_block_cha.1} parent=5 // pred_check_branch
      %323 = sbr.rel (%p320) target = $region12
    $region11: #{fre_block_cha.1} parent=5 // pred_region
      %s324 = ssub.s32 %s18, 1
      // Predicated region
      $region13: #{fre_block_cha.1} parent=11 // pred_check
        %p325 = pneg %p107
      $region14: #{fre_block_cha.1} parent=11 // pred_check_branch
        %327 = sbr.rel (%p325) target = $region16
      $region15: #{fre_block_cha.1} parent=11 // pred_region
        _
      $region16: #{fre_block_cha.1} parent=11 // pred_fallthru
        _
      // Predicated region
      $region17: #{fre_block_cha.1} parent=11 // pred_check
        %p328 = pneg %p128
      $region18: #{fre_block_cha.1} parent=11 // pred_check_branch
        %330 = sbr.rel (%p328) target = $region20
      $region19: #{fre_block_cha.1} parent=11 // pred_region
        _
      $region20: #{fre_block_cha.1} parent=11 // pred_fallthru
        _
      // Predicated region
      $region21: #{fre_block_cha.1} parent=11 // pred_check
        %p331 = pneg %p149
      $region22: #{fre_block_cha.1} parent=11 // pred_check_branch
        %333 = sbr.rel (%p331) target = $region24
      $region23: #{fre_block_cha.1} parent=11 // pred_region
        _
      $region24: #{fre_block_cha.1} parent=11 // pred_fallthru
        _
      // Predicated region
      $region25: #{fre_block_cha.1} parent=11 // pred_check
        %p334 = pneg %p170
      $region26: #{fre_block_cha.1} parent=11 // pred_check_branch
        %336 = sbr.rel (%p334) target = $region28
      $region27: #{fre_block_cha.1} parent=11 // pred_region
        _
      $region28: #{fre_block_cha.1} parent=11 // pred_fallthru
        _
      // Predicated region
      $region29: #{fre_block_cha.1} parent=11 // pred_check
        %p337 = pneg %p191
      $region30: #{fre_block_cha.1} parent=11 // pred_check_branch
        %339 = sbr.rel (%p337) target = $region32
      $region31: #{fre_block_cha.1} parent=11 // pred_region
        _
      $region32: #{fre_block_cha.1} parent=11 // pred_fallthru
        _
      // Predicated region
      $region33: #{fre_block_cha.1} parent=11 // pred_check
        %p340 = pneg %p212
      $region34: #{fre_block_cha.1} parent=11 // pred_check_branch
        %342 = sbr.rel (%p340) target = $region36
      $region35: #{fre_block_cha.1} parent=11 // pred_region
        _
      $region36: #{fre_block_cha.1} parent=11 // pred_fallthru
        _
      // Predicated region
      $region37: #{fre_block_cha.1} parent=11 // pred_check
        %p343 = pneg %p233
      $region38: #{fre_block_cha.1} parent=11 // pred_check_branch
        %345 = sbr.rel (%p343) target = $region40
      $region39: #{fre_block_cha.1} parent=11 // pred_region
        _
      $region40: #{fre_block_cha.1} parent=11 // pred_fallthru
        _
      // Predicated region
      $region41: #{fre_block_cha.1} parent=11 // pred_check
        %p346 = pneg %p254
      $region42: #{fre_block_cha.1} parent=11 // pred_check_branch
        %348 = sbr.rel (%p346) target = $region44
      $region43: #{fre_block_cha.1} parent=11 // pred_region
        _
      $region44: #{fre_block_cha.1} parent=11 // pred_fallthru
        _
    $region12: #{fre_block_cha.1} parent=5 // pred_fallthru
      _
    %p349 = scmp.lt.s32.totalorder %s18, 2
    // Predicated region
    $region45: #{fre_block_cha.1} parent=5 // pred_check
      %p350 = pneg %p349
    $region46: #{fre_block_cha.1} parent=5 // pred_check_branch
      %352 = sbr.rel (%p350) target = $region48
    $region47: #{fre_block_cha.1} parent=5 // pred_region
      // Predicated region
      $region49: #{fre_block_cha.1} parent=47 // pred_check
        %p353 = pneg %p52
      $region50: #{fre_block_cha.1} parent=47 // pred_check_branch
        %355 = sbr.rel (%p353) target = $region52
      $region51: #{fre_block_cha.1} parent=47 // pred_region
        %s356 = smul.u32 2, %s26
        %p357 = scmp.lt.s32.totalorder %s25, 1
        %s358 = scalar_select %p357, %s25, 1
        %p359 = scmp.lt.s32.totalorder %s356, 1
        %s360 = scalar_select %p359, %s356, 1
        %s361 = smul.addr %s358, 2
        %s362 = sadd.s32 %s360, %s361
        %s363 = smul.addr %s362, 4
        %s364 = scalar_lea.vmem %s0, %s363
        %s365 = smul.u32 2, %s26
      $region52: #{fre_block_cha.1} parent=47 // pred_fallthru
        _
      // Predicated region
      $region53: #{fre_block_cha.1} parent=47 // pred_check
        %p366 = pneg %p80
      $region54: #{fre_block_cha.1} parent=47 // pred_check_branch
        %368 = sbr.rel (%p366) target = $region56
      $region55: #{fre_block_cha.1} parent=47 // pred_region
        %s369 = smul.u32 2, %s26
        %p370 = scmp.lt.s32.totalorder %s25, 1
        %s371 = scalar_select %p370, %s25, 1
        %p372 = scmp.lt.s32.totalorder %s369, 1
        %s373 = scalar_select %p372, %s369, 1
        %s374 = smul.addr %s371, 2
        %s375 = sadd.s32 %s373, %s374
        %s376 = smul.addr %s375, 4
        %s377 = scalar_lea.vmem %s1, %s376
        %s378 = smul.u32 2, %s26
      $region56: #{fre_block_cha.1} parent=47 // pred_fallthru
        _
    $region48: #{fre_block_cha.1} parent=5 // pred_fallthru
      _
    %p379 = scmp.le.s32.totalorder 1, %s18
    %p380 = scmp.lt.s32.totalorder %s18, 3
    %p381 = pnand %p379, %p380
    %p382 = pneg %p381
    // Predicated region
    $region57: #{fre_block_cha.1} parent=5 // pred_check
      _
    $region58: #{fre_block_cha.1} parent=5 // pred_check_branch
      %384 = sbr.rel (%p381) target = $region60
    $region59: #{fre_block_cha.1} parent=5 // pred_region
      %s385 = ssub.s32 %s18, 1
      %s386 = smul.u32 2, %s28
      %p387 = scmp.lt.s32.totalorder %s27, 1
      %s388 = scalar_select %p387, %s27, 1
      %p389 = scmp.lt.s32.totalorder %s386, 1
      %s390 = scalar_select %p389, %s386, 1
      %s391 = smul.addr %s388, 2
      %s392 = sadd.s32 %s390, %s391
      %s393 = smul.addr %s392, 4
      %s394 = scalar_lea.vmem %s0, %s393
      %p395 = pneg %p58
      %p396 = pneg %p55
      %s397 = smul.u32 2, %s28
      %p398 = scmp.lt.s32.totalorder %s27, 1
      %s399 = scalar_select %p398, %s27, 1
      %p400 = scmp.lt.s32.totalorder %s397, 1
      %s401 = scalar_select %p400, %s397, 1
      %s402 = smul.addr %s399, 2
      %s403 = sadd.s32 %s401, %s402
      %s404 = smul.addr %s403, 4
      %s405 = scalar_lea.vmem %s1, %s404
      %p406 = pneg %p86
      %p407 = pneg %p83
      %p408 = pneg %p107
      %p409 = pneg %p104
      %p410 = pneg %p128
      %p411 = pneg %p125
      %p412 = pneg %p149
      %p413 = pneg %p146
      %p414 = pneg %p170
      %p415 = pneg %p167
      %p416 = pneg %p191
      %p417 = pneg %p188
      %p418 = pneg %p212
      %p419 = pneg %p209
      %p420 = pneg %p233
      %p421 = pneg %p230
      %p422 = pneg %p254
      %p423 = pneg %p251
      %p424 = pneg %p282
      %p425 = pneg %p279
      %s426 = smul.u32 2, %s28
      %p427 = scmp.lt.s32.totalorder %s27, 1
      %s428 = scalar_select %p427, %s27, 1
      %p429 = scmp.lt.s32.totalorder %s426, 1
      %s430 = scalar_select %p429, %s426, 1
      %s431 = smul.addr %s428, 2
      %s432 = sadd.s32 %s430, %s431
      %s433 = smul.addr %s432, 4
      %s434 = scalar_lea.vmem %s10, %s433
      %p435 = pneg %p310
      %p436 = pneg %p307
      %s437 = smul.u32 2, %s28
      %p438 = scmp.lt.s32.totalorder %s27, 1
      %s439 = scalar_select %p438, %s27, 1
      %p440 = scmp.lt.s32.totalorder %s437, 1
      %s441 = scalar_select %p440, %s437, 1
      %s442 = smul.addr %s439, 2
      %s443 = sadd.s32 %s441, %s442
      %s444 = smul.addr %s443, 4
      %s445 = scalar_lea.vmem %s11, %s444
      %s446 = smul.u32 2, %s28
      %p447 = scmp.lt.s32.totalorder %s27, 1
      %s448 = scalar_select %p447, %s27, 1
      %p449 = scmp.lt.s32.totalorder %s446, 1
      %s450 = scalar_select %p449, %s446, 1
      %s451 = smul.addr %s448, 2
      %s452 = sadd.s32 %s450, %s451
      %s453 = smul.addr %s452, 4
      %s454 = scalar_lea.vmem %s0, %s453
      %s455 = smul.u32 2, %s28
      %s456 = smul.u32 2, %s28
      %p457 = scmp.lt.s32.totalorder %s27, 1
      %s458 = scalar_select %p457, %s27, 1
      %p459 = scmp.lt.s32.totalorder %s456, 1
      %s460 = scalar_select %p459, %s456, 1
      %s461 = smul.addr %s458, 2
      %s462 = sadd.s32 %s460, %s461
      %s463 = smul.addr %s462, 4
      %s464 = scalar_lea.vmem %s1, %s463
      %s465 = smul.u32 2, %s28
      %s466 = smul.u32 2, %s28
      %p467 = scmp.lt.s32.totalorder %s27, 1
      %s468 = scalar_select %p467, %s27, 1
      %p469 = scmp.lt.s32.totalorder %s466, 1
      %s470 = scalar_select %p469, %s466, 1
      %s471 = smul.addr %s468, 2
      %s472 = sadd.s32 %s470, %s471
      %s473 = smul.addr %s472, 4
      %s474 = scalar_lea.vmem %s10, %s473
      %s475 = smul.u32 2, %s28
      %s476 = smul.u32 2, %s28
      %p477 = scmp.lt.s32.totalorder %s27, 1
      %s478 = scalar_select %p477, %s27, 1
      %p479 = scmp.lt.s32.totalorder %s476, 1
      %s480 = scalar_select %p479, %s476, 1
      %s481 = smul.addr %s478, 2
      %s482 = sadd.s32 %s480, %s481
      %s483 = smul.addr %s482, 4
      %s484 = scalar_lea.vmem %s11, %s483
      %s485 = smul.u32 2, %s28
      %v486 = vld [vmem:[%s454] sm:$0xff]
      %v487 = vld [vmem:[%s2] sm:$0xf]
      %v488 = vld [vmem:[%s3] sm:$0xf]
      %v489 = vld [vmem:[%s4] sm:$0xf]
      %v490 = vld [vmem:[%s5] sm:$0xf]
      %492 = vset.pattern.permute.xlu0 0
      %493 = vperm.xlu0 %492, %v487
      %v494 = vpop.permute.xlu0 %493
      %v497 = vlaneseq
      %v498 = vshrl.u32 %v497, 7
      %v499 = vsub.s32 0, %v498
      %v500 = vrot.slane %v486, %v499
      %v501 = vlaneseq
      %v502 = vshrl.u32 %v501, 7
      %v503 = vsub.s32 4, %v502
      %v504 = vrot.slane %v486, %v503
      %v507 = vlaneseq
      %v508 = vshrl.u32 %v507, 7
      %v509 = vsub.s32 0, %v508
      %v510 = vrot.slane %v500, %v509
      %v511 = vlaneseq
      %v512 = vshrl.u32 %v511, 7
      %v513 = vsub.s32 0, %v512
      %v514 = vrot.slane %v504, %v513
      %v515 = vmul.f32 %v494, %v510
      %v516 = vmul.f32 %v494, %v514
      %517 = vset.pattern.permute.xlu0 1
      %518 = vperm.xlu0 %517, %v487
      %v519 = vpop.permute.xlu0 %518
      %v521 = vlaneseq
      %v522 = vshrl.u32 %v521, 7
      %v523 = vsub.s32 1, %v522
      %v524 = vrot.slane %v486, %v523
      %v525 = vlaneseq
      %v526 = vshrl.u32 %v525, 7
      %v527 = vsub.s32 5, %v526
      %v528 = vrot.slane %v486, %v527
      %v531 = vlaneseq
      %v532 = vshrl.u32 %v531, 7
      %v533 = vsub.s32 1, %v532
      %v534 = vrot.slane %v524, %v533
      %v535 = vlaneseq
      %v536 = vshrl.u32 %v535, 7
      %v537 = vsub.s32 1, %v536
      %v538 = vrot.slane %v528, %v537
      %v539 = vmul.f32 %v519, %v534
      %v540 = vmul.f32 %v519, %v538
      %v541 = vadd.f32 %v515, %v539
      %v542 = vadd.f32 %v516, %v540
      %543 = vset.pattern.permute.xlu0 2
      %544 = vperm.xlu0 %543, %v487
      %v545 = vpop.permute.xlu0 %544
      %v547 = vlaneseq
      %v548 = vshrl.u32 %v547, 7
      %v549 = vsub.s32 2, %v548
      %v550 = vrot.slane %v486, %v549
      %v551 = vlaneseq
      %v552 = vshrl.u32 %v551, 7
      %v553 = vsub.s32 6, %v552
      %v554 = vrot.slane %v486, %v553
      %v557 = vlaneseq
      %v558 = vshrl.u32 %v557, 7
      %v559 = vsub.s32 2, %v558
      %v560 = vrot.slane %v550, %v559
      %v561 = vlaneseq
      %v562 = vshrl.u32 %v561, 7
      %v563 = vsub.s32 2, %v562
      %v564 = vrot.slane %v554, %v563
      %v565 = vmul.f32 %v545, %v560
      %v566 = vmul.f32 %v545, %v564
      %v567 = vadd.f32 %v541, %v565
      %v568 = vadd.f32 %v542, %v566
      %569 = vset.pattern.permute.xlu0 3
      %570 = vperm.xlu0 %569, %v487
      %v571 = vpop.permute.xlu0 %570
      %v573 = vlaneseq
      %v574 = vshrl.u32 %v573, 7
      %v575 = vsub.s32 3, %v574
      %v576 = vrot.slane %v486, %v575
      %v577 = vlaneseq
      %v578 = vshrl.u32 %v577, 7
      %v579 = vsub.s32 7, %v578
      %v580 = vrot.slane %v486, %v579
      %v583 = vlaneseq
      %v584 = vshrl.u32 %v583, 7
      %v585 = vsub.s32 3, %v584
      %v586 = vrot.slane %v576, %v585
      %v587 = vlaneseq
      %v588 = vshrl.u32 %v587, 7
      %v589 = vsub.s32 3, %v588
      %v590 = vrot.slane %v580, %v589
      %v591 = vmul.f32 %v571, %v586
      %v592 = vmul.f32 %v571, %v590
      %v593 = vadd.f32 %v567, %v591
      %v594 = vadd.f32 %v568, %v592
      %596 = vset.pattern.permute.xlu0 0
      %597 = vperm.xlu0 %596, %v488
      %v598 = vpop.permute.xlu0 %597
      %v600 = vadd.f32 %v593, %v598
      %v601 = vadd.f32 %v594, %v598
      %vm602 = vcmp.ge.f32.partialorder %v600, 0.0
      %vm603 = vcmp.ge.f32.partialorder %v601, 0.0
      %v604 = vmul.f32 %v600, 0.1
      %v605 = vmul.f32 %v601, 0.1
      %v606 = vsel %vm602, %v600, %v604
      %v607 = vsel %vm603, %v601, %v605
      %609 = vset.pattern.permute.xlu0 0
      %610 = vperm.xlu0 %609, %v489
      %v611 = vpop.permute.xlu0 %610
      %v613 = vlaneseq
      %v614 = vshrl.u32 %v613, 7
      %v615 = vsub.s32 0, %v614
      %v616 = vrot.slane %v606, %v615
      %v617 = vlaneseq
      %v618 = vshrl.u32 %v617, 7
      %v619 = vsub.s32 0, %v618
      %v620 = vrot.slane %v607, %v619
      %v621 = vmul.f32 %v611, %v616
      %v622 = vmul.f32 %v611, %v620
      %623 = vset.pattern.permute.xlu0 1
      %624 = vperm.xlu0 %623, %v489
      %v625 = vpop.permute.xlu0 %624
      %v627 = vlaneseq
      %v628 = vshrl.u32 %v627, 7
      %v629 = vsub.s32 1, %v628
      %v630 = vrot.slane %v606, %v629
      %v631 = vlaneseq
      %v632 = vshrl.u32 %v631, 7
      %v633 = vsub.s32 1, %v632
      %v634 = vrot.slane %v607, %v633
      %v635 = vmul.f32 %v625, %v630
      %v636 = vmul.f32 %v625, %v634
      %v637 = vadd.f32 %v621, %v635
      %v638 = vadd.f32 %v622, %v636
      %639 = vset.pattern.permute.xlu0 2
      %640 = vperm.xlu0 %639, %v489
      %v641 = vpop.permute.xlu0 %640
      %v643 = vlaneseq
      %v644 = vshrl.u32 %v643, 7
      %v645 = vsub.s32 2, %v644
      %v646 = vrot.slane %v606, %v645
      %v647 = vlaneseq
      %v648 = vshrl.u32 %v647, 7
      %v649 = vsub.s32 2, %v648
      %v650 = vrot.slane %v607, %v649
      %v651 = vmul.f32 %v641, %v646
      %v652 = vmul.f32 %v641, %v650
      %v653 = vadd.f32 %v637, %v651
      %v654 = vadd.f32 %v638, %v652
      %655 = vset.pattern.permute.xlu0 3
      %656 = vperm.xlu0 %655, %v489
      %v657 = vpop.permute.xlu0 %656
      %v659 = vlaneseq
      %v660 = vshrl.u32 %v659, 7
      %v661 = vsub.s32 3, %v660
      %v662 = vrot.slane %v606, %v661
      %v663 = vlaneseq
      %v664 = vshrl.u32 %v663, 7
      %v665 = vsub.s32 3, %v664
      %v666 = vrot.slane %v607, %v665
      %v667 = vmul.f32 %v657, %v662
      %v668 = vmul.f32 %v657, %v666
      %v669 = vadd.f32 %v653, %v667
      %v670 = vadd.f32 %v654, %v668
      %672 = vset.pattern.permute.xlu0 0
      %673 = vperm.xlu0 %672, %v490
      %v674 = vpop.permute.xlu0 %673
      %v676 = vadd.f32 %v669, %v674
      %v677 = vadd.f32 %v670, %v674
      %v680 = vcombine.low %v676, %v677
      %682 = vst [vmem:[%s474] sm:$0xff] %v680
      %v683 = vld [vmem:[%s464] sm:$0xff]
      %v684 = vld [vmem:[%s6] sm:$0xf]
      %v685 = vld [vmem:[%s7] sm:$0xf]
      %v686 = vld [vmem:[%s8] sm:$0xf]
      %v687 = vld [vmem:[%s9] sm:$0xf]
      %689 = vset.pattern.permute.xlu0 0
      %690 = vperm.xlu0 %689, %v684
      %v691 = vpop.permute.xlu0 %690
      %v694 = vlaneseq
      %v695 = vshrl.u32 %v694, 7
      %v696 = vsub.s32 0, %v695
      %v697 = vrot.slane %v683, %v696
      %v698 = vlaneseq
      %v699 = vshrl.u32 %v698, 7
      %v700 = vsub.s32 4, %v699
      %v701 = vrot.slane %v683, %v700
      %v704 = vlaneseq
      %v705 = vshrl.u32 %v704, 7
      %v706 = vsub.s32 0, %v705
      %v707 = vrot.slane %v697, %v706
      %v708 = vlaneseq
      %v709 = vshrl.u32 %v708, 7
      %v710 = vsub.s32 0, %v709
      %v711 = vrot.slane %v701, %v710
      %v712 = vmul.f32 %v691, %v707
      %v713 = vmul.f32 %v691, %v711
      %714 = vset.pattern.permute.xlu0 1
      %715 = vperm.xlu0 %714, %v684
      %v716 = vpop.permute.xlu0 %715
      %v718 = vlaneseq
      %v719 = vshrl.u32 %v718, 7
      %v720 = vsub.s32 1, %v719
      %v721 = vrot.slane %v683, %v720
      %v722 = vlaneseq
      %v723 = vshrl.u32 %v722, 7
      %v724 = vsub.s32 5, %v723
      %v725 = vrot.slane %v683, %v724
      %v728 = vlaneseq
      %v729 = vshrl.u32 %v728, 7
      %v730 = vsub.s32 1, %v729
      %v731 = vrot.slane %v721, %v730
      %v732 = vlaneseq
      %v733 = vshrl.u32 %v732, 7
      %v734 = vsub.s32 1, %v733
      %v735 = vrot.slane %v725, %v734
      %v736 = vmul.f32 %v716, %v731
      %v737 = vmul.f32 %v716, %v735
      %v738 = vadd.f32 %v712, %v736
      %v739 = vadd.f32 %v713, %v737
      %740 = vset.pattern.permute.xlu0 2
      %741 = vperm.xlu0 %740, %v684
      %v742 = vpop.permute.xlu0 %741
      %v744 = vlaneseq
      %v745 = vshrl.u32 %v744, 7
      %v746 = vsub.s32 2, %v745
      %v747 = vrot.slane %v683, %v746
      %v748 = vlaneseq
      %v749 = vshrl.u32 %v748, 7
      %v750 = vsub.s32 6, %v749
      %v751 = vrot.slane %v683, %v750
      %v754 = vlaneseq
      %v755 = vshrl.u32 %v754, 7
      %v756 = vsub.s32 2, %v755
      %v757 = vrot.slane %v747, %v756
      %v758 = vlaneseq
      %v759 = vshrl.u32 %v758, 7
      %v760 = vsub.s32 2, %v759
      %v761 = vrot.slane %v751, %v760
      %v762 = vmul.f32 %v742, %v757
      %v763 = vmul.f32 %v742, %v761
      %v764 = vadd.f32 %v738, %v762
      %v765 = vadd.f32 %v739, %v763
      %766 = vset.pattern.permute.xlu0 3
      %767 = vperm.xlu0 %766, %v684
      %v768 = vpop.permute.xlu0 %767
      %v770 = vlaneseq
      %v771 = vshrl.u32 %v770, 7
      %v772 = vsub.s32 3, %v771
      %v773 = vrot.slane %v683, %v772
      %v774 = vlaneseq
      %v775 = vshrl.u32 %v774, 7
      %v776 = vsub.s32 7, %v775
      %v777 = vrot.slane %v683, %v776
      %v780 = vlaneseq
      %v781 = vshrl.u32 %v780, 7
      %v782 = vsub.s32 3, %v781
      %v783 = vrot.slane %v773, %v782
      %v784 = vlaneseq
      %v785 = vshrl.u32 %v784, 7
      %v786 = vsub.s32 3, %v785
      %v787 = vrot.slane %v777, %v786
      %v788 = vmul.f32 %v768, %v783
      %v789 = vmul.f32 %v768, %v787
      %v790 = vadd.f32 %v764, %v788
      %v791 = vadd.f32 %v765, %v789
      %793 = vset.pattern.permute.xlu0 0
      %794 = vperm.xlu0 %793, %v685
      %v795 = vpop.permute.xlu0 %794
      %v797 = vadd.f32 %v790, %v795
      %v798 = vadd.f32 %v791, %v795
      %vm799 = vcmp.ge.f32.partialorder %v797, 0.0
      %vm800 = vcmp.ge.f32.partialorder %v798, 0.0
      %v801 = vmul.f32 %v797, 0.1
      %v802 = vmul.f32 %v798, 0.1
      %v803 = vsel %vm799, %v797, %v801
      %v804 = vsel %vm800, %v798, %v802
      %806 = vset.pattern.permute.xlu0 0
      %807 = vperm.xlu0 %806, %v686
      %v808 = vpop.permute.xlu0 %807
      %v810 = vlaneseq
      %v811 = vshrl.u32 %v810, 7
      %v812 = vsub.s32 0, %v811
      %v813 = vrot.slane %v803, %v812
      %v814 = vlaneseq
      %v815 = vshrl.u32 %v814, 7
      %v816 = vsub.s32 0, %v815
      %v817 = vrot.slane %v804, %v816
      %v818 = vmul.f32 %v808, %v813
      %v819 = vmul.f32 %v808, %v817
      %820 = vset.pattern.permute.xlu0 1
      %821 = vperm.xlu0 %820, %v686
      %v822 = vpop.permute.xlu0 %821
      %v824 = vlaneseq
      %v825 = vshrl.u32 %v824, 7
      %v826 = vsub.s32 1, %v825
      %v827 = vrot.slane %v803, %v826
      %v828 = vlaneseq
      %v829 = vshrl.u32 %v828, 7
      %v830 = vsub.s32 1, %v829
      %v831 = vrot.slane %v804, %v830
      %v832 = vmul.f32 %v822, %v827
      %v833 = vmul.f32 %v822, %v831
      %v834 = vadd.f32 %v818, %v832
      %v835 = vadd.f32 %v819, %v833
      %836 = vset.pattern.permute.xlu0 2
      %837 = vperm.xlu0 %836, %v686
      %v838 = vpop.permute.xlu0 %837
      %v840 = vlaneseq
      %v841 = vshrl.u32 %v840, 7
      %v842 = vsub.s32 2, %v841
      %v843 = vrot.slane %v803, %v842
      %v844 = vlaneseq
      %v845 = vshrl.u32 %v844, 7
      %v846 = vsub.s32 2, %v845
      %v847 = vrot.slane %v804, %v846
      %v848 = vmul.f32 %v838, %v843
      %v849 = vmul.f32 %v838, %v847
      %v850 = vadd.f32 %v834, %v848
      %v851 = vadd.f32 %v835, %v849
      %852 = vset.pattern.permute.xlu0 3
      %853 = vperm.xlu0 %852, %v686
      %v854 = vpop.permute.xlu0 %853
      %v856 = vlaneseq
      %v857 = vshrl.u32 %v856, 7
      %v858 = vsub.s32 3, %v857
      %v859 = vrot.slane %v803, %v858
      %v860 = vlaneseq
      %v861 = vshrl.u32 %v860, 7
      %v862 = vsub.s32 3, %v861
      %v863 = vrot.slane %v804, %v862
      %v864 = vmul.f32 %v854, %v859
      %v865 = vmul.f32 %v854, %v863
      %v866 = vadd.f32 %v850, %v864
      %v867 = vadd.f32 %v851, %v865
      %869 = vset.pattern.permute.xlu0 0
      %870 = vperm.xlu0 %869, %v687
      %v871 = vpop.permute.xlu0 %870
      %v873 = vadd.f32 %v866, %v871
      %v874 = vadd.f32 %v867, %v871
      %v877 = vcombine.low %v873, %v874
      %879 = vst [vmem:[%s484] sm:$0xff] %v877
      %s880 = smul.u32 2, %s28
      %p881 = scmp.lt.s32.totalorder %s27, 1
      %s882 = scalar_select %p881, %s27, 1
      %p883 = scmp.lt.s32.totalorder %s880, 1
      %s884 = scalar_select %p883, %s880, 1
      %s885 = smul.addr %s882, 2
      %s886 = sadd.s32 %s884, %s885
      %s887 = smul.addr %s886, 4
      %s888 = scalar_lea.vmem %s10, %s887
      %s889 = smul.u32 2, %s28
      %p890 = scmp.lt.s32.totalorder %s27, 1
      %s891 = scalar_select %p890, %s27, 1
      %p892 = scmp.lt.s32.totalorder %s889, 1
      %s893 = scalar_select %p892, %s889, 1
      %s894 = smul.addr %s891, 2
      %s895 = sadd.s32 %s893, %s894
      %s896 = smul.addr %s895, 4
      %s897 = scalar_lea.vmem %s11, %s896
      // Predicated region
      $region61: #{fre_block_cha.1} parent=59 // pred_check
        %p898 = pneg %p279
      $region62: #{fre_block_cha.1} parent=59 // pred_check_branch
        %900 = sbr.rel (%p898) target = $region64
      $region63: #{fre_block_cha.1} parent=59 // pred_region
        %s901 = smul.u32 2, %s28
      $region64: #{fre_block_cha.1} parent=59 // pred_fallthru
        _
      // Predicated region
      $region65: #{fre_block_cha.1} parent=59 // pred_check
        %p902 = pneg %p307
      $region66: #{fre_block_cha.1} parent=59 // pred_check_branch
        %904 = sbr.rel (%p902) target = $region68
      $region67: #{fre_block_cha.1} parent=59 // pred_region
        %s905 = smul.u32 2, %s28
      $region68: #{fre_block_cha.1} parent=59 // pred_fallthru
        _
    $region60: #{fre_block_cha.1} parent=5 // pred_fallthru
      _
    %p906 = scmp.le.s32.totalorder 2, %s18
    // Predicated region
    $region69: #{fre_block_cha.1} parent=5 // pred_check
      %p907 = pneg %p906
    $region70: #{fre_block_cha.1} parent=5 // pred_check_branch
      %909 = sbr.rel (%p907) target = $region72
    $region71: #{fre_block_cha.1} parent=5 // pred_region
      %s910 = ssub.s32 %s18, 2
      // Predicated region
      $region73: #{fre_block_cha.1} parent=71 // pred_check
        %p911 = pneg %p285
      $region74: #{fre_block_cha.1} parent=71 // pred_check_branch
        %913 = sbr.rel (%p911) target = $region76
      $region75: #{fre_block_cha.1} parent=71 // pred_region
        %s914 = smul.u32 2, %s30
        %p915 = scmp.lt.s32.totalorder %s29, 1
        %s916 = scalar_select %p915, %s29, 1
        %p917 = scmp.lt.s32.totalorder %s914, 1
        %s918 = scalar_select %p917, %s914, 1
        %s919 = smul.addr %s916, 2
        %s920 = sadd.s32 %s918, %s919
        %s921 = smul.addr %s920, 4
        %s922 = scalar_lea.vmem %s10, %s921
      $region76: #{fre_block_cha.1} parent=71 // pred_fallthru
        _
      // Predicated region
      $region77: #{fre_block_cha.1} parent=71 // pred_check
        %p923 = pneg %p313
      $region78: #{fre_block_cha.1} parent=71 // pred_check_branch
        %925 = sbr.rel (%p923) target = $region80
      $region79: #{fre_block_cha.1} parent=71 // pred_region
        %s926 = smul.u32 2, %s30
        %p927 = scmp.lt.s32.totalorder %s29, 1
        %s928 = scalar_select %p927, %s29, 1
        %p929 = scmp.lt.s32.totalorder %s926, 1
        %s930 = scalar_select %p929, %s926, 1
        %s931 = smul.addr %s928, 2
        %s932 = sadd.s32 %s930, %s931
        %s933 = smul.addr %s932, 4
        %s934 = scalar_lea.vmem %s11, %s933
      $region80: #{fre_block_cha.1} parent=71 // pred_fallthru
        _
    $region72: #{fre_block_cha.1} parent=5 // pred_fallthru
      _
  $region6: #{fre_block_cha.1} parent=0 // loop_footer
    %s22 = sadd.s32 1, %s18
  $region7: #{fre_block_cha.1} parent=0 // loop_footer_branch
    %17 = sbr.rel target = $region3
  $region8: #{fre_block_cha.1} parent=0 // loop_exit
    _

</llo_original>
